<compile_context>
chip_gen: v5e
topology: v5e:2x2
jax: 0.10.0
libtpu: 0.0.40
codegen_flags: <defaults>
</compile_context>

<pallas_src>
import functools

import jax
import jax.numpy as jnp
from jax.experimental import pallas as pl
from jax.experimental.pallas import tpu as pltpu

# Small config consistent with the module (production sizes scale trivially).
NUM_FEATURES = 7 + 4          # len(self.features) + 4 == 11
NUM_LAYERS = 2                # MLPBase `layers`
LAYER_SIZE = 32               # `layer_size`
BATCH = 300                   # exercises batch padding + a multi-step grid
TILE_M = 256                  # batch rows per grid step (sublane-aligned)
COMPUTE_DTYPE = jnp.bfloat16  # MXU input dtype; accumulation stays float32


def _lstm_mlp_kernel(num_layers,
                     x_ref, w1_ref, b1_ref, wm_ref, bm_ref, w2_ref, b2_ref,
                     o_ref):
    cdt = w1_ref.dtype          # bf16 weights -> bf16 MXU inputs
    # fc1 + ReLU (f32 accumulate, f32 elementwise on the VPU).
    h = jnp.dot(x_ref[...].astype(cdt), w1_ref[...],
                preferred_element_type=jnp.float32) + b1_ref[...]
    h = jnp.maximum(h, 0.0)
    # MLPBase: `num_layers` x (Linear + ReLU). num_layers is a static Python
    # int, so this unrolls into straight-line MXU ops (LLO sees everything).
    for i in range(num_layers):
        h = jnp.dot(h.astype(cdt), wm_ref[i],
                    preferred_element_type=jnp.float32) + bm_ref[i]
        h = jnp.maximum(h, 0.0)
    # fc2: contract w2 (1, L) against the hidden dim of h (TILE_M, L) so the
    # result is a lane-dense (1, TILE_M) tile (batch -> lanes). Avoids an N=1
    # MXU output and masked lane-width-1 stores.
    y = jax.lax.dot_general(w2_ref[...], h.astype(cdt),
                            dimension_numbers=(((1,), (1,)), ((), ())),
                            preferred_element_type=jnp.float32)
    o_ref[...] = (y + b2_ref[...]).astype(o_ref.dtype)


def lstm_mlp_forward(x, w1, b1, wm, bm, w2, b2, *, tile_m=TILE_M,
                     compute_dtype=COMPUTE_DTYPE):
    """LSTMMLP forward. w1/wm are (in, out); w2 is (1, L) (PyTorch layout).

    Returns (batch, 1) float32, matching the PyTorch module.
    """
    batch, num_features = x.shape
    num_layers, layer_size, _ = wm.shape

    # Pad batch to a multiple of the tile; one grid step per tile.
    padded = pl.cdiv(batch, tile_m) * tile_m
    if padded != batch:
        x = jnp.pad(x, ((0, padded - batch), (0, 0)))
    grid = (padded // tile_m,)

    # bf16 weights into the MXU; biases stay f32 (f32 VPU work on all gens).
    w1c = w1.astype(compute_dtype)
    wmc = wm.astype(compute_dtype)
    w2c = w2.astype(compute_dtype)

    kernel = functools.partial(_lstm_mlp_kernel, num_layers)

    flops = 2 * padded * (num_features * layer_size
                          + num_layers * layer_size * layer_size
                          + layer_size)
    weight_bytes = ((w1c.size + wmc.size + w2c.size) * 2
                    + (b1.size + bm.size + b2.size) * 4)
    bytes_accessed = x.size * 4 + weight_bytes + padded * 4
    # VMEM budget: resident weights + double-buffered x/out tiles + headroom.
    tile_bytes = tile_m * num_features * 4 + tile_m * 4
    vmem_limit = int(min(64 * 1024 * 1024,
                         max(16 * 1024 * 1024,
                             8 * (weight_bytes + 4 * tile_bytes))))

    out = pl.pallas_call(
        kernel,
        out_shape=jax.ShapeDtypeStruct((1, padded), jnp.float32),
        grid_spec=pltpu.PrefetchScalarGridSpec(
            num_scalar_prefetch=0,
            grid=grid,
            in_specs=[
                pl.BlockSpec((tile_m, num_features), lambda i: (i, 0)),
                # Weights/biases: constant block index => DMA'd once, resident.
                pl.BlockSpec((num_features, layer_size), lambda i: (0, 0)),
                pl.BlockSpec((1, layer_size), lambda i: (0, 0)),
                pl.BlockSpec((num_layers, layer_size, layer_size),
                             lambda i: (0, 0, 0)),
                pl.BlockSpec((num_layers, 1, layer_size),
                             lambda i: (0, 0, 0)),
                pl.BlockSpec((1, layer_size), lambda i: (0, 0)),
                pl.BlockSpec((1, 1), lambda i: (0, 0)),
            ],
            out_specs=pl.BlockSpec((1, tile_m), lambda i: (0, i)),
        ),
        compiler_params=pltpu.CompilerParams(
            dimension_semantics=("parallel",),   # v7x: shard tiles over 2 TCs
            vmem_limit_bytes=vmem_limit,
        ),
        cost_estimate=pl.CostEstimate(
            flops=flops, transcendentals=0, bytes_accessed=bytes_accessed),
    )(x, w1c, b1, wmc, bm, w2c, b2)

    # Lane-dense (1, padded) -> module layout (batch, 1).
    return out[0, :batch].reshape(batch, 1)


def init_params(key, layers, layer_size, num_features):
    """PyTorch-Linear-like uniform init. w1/wm stored as (in, out); w2 kept in
    PyTorch's (out=1, in=L) layout so the kernel contracts it against h's
    hidden dim and emits a lane-dense output tile."""
    keys = jax.random.split(key, 2 + layers)

    def linear(k, fan_in, fan_out):
        bound = 1.0 / jnp.sqrt(fan_in)
        kw, kb = jax.random.split(k)
        w = jax.random.uniform(kw, (fan_in, fan_out), jnp.float32, -bound, bound)
        b = jax.random.uniform(kb, (1, fan_out), jnp.float32, -bound, bound)
        return w, b

    w1, b1 = linear(keys[0], num_features, layer_size)
    wm_list, bm_list = [], []
    for i in range(layers):
        w, b = linear(keys[1 + i], layer_size, layer_size)
        wm_list.append(w)
        bm_list.append(b)
    wm = jnp.stack(wm_list, axis=0)                      # (layers, L, L)
    bm = jnp.stack(bm_list, axis=0)                      # (layers, 1, L)
    w2_io, b2 = linear(keys[1 + layers], layer_size, 1)  # (L, 1), (1, 1)
    w2 = w2_io.T                                         # (1, L)
    return w1, b1, wm, bm, w2, b2


def reference_forward(x, w1, b1, wm, bm, w2, b2, compute_dtype=jnp.float32):
    def mm(a, b):
        return jnp.dot(a.astype(compute_dtype), b.astype(compute_dtype),
                       preferred_element_type=jnp.float32)
    h = jnp.maximum(mm(x, w1) + b1, 0.0)
    for i in range(wm.shape[0]):
        h = jnp.maximum(mm(h, wm[i]) + bm[i], 0.0)
    return mm(h, w2.T) + b2


if __name__ == "__main__":
    key = jax.random.PRNGKey(0)
    kx, kp = jax.random.split(key)
    x = jax.random.normal(kx, (BATCH, NUM_FEATURES), jnp.float32)
    params = init_params(kp, NUM_LAYERS, LAYER_SIZE, NUM_FEATURES)

    out = jax.block_until_ready(lstm_mlp_forward(x, *params))
    assert out.shape == (BATCH, 1), out.shape

    # Matched-precision reference (bf16 matmul inputs, f32 accumulation).
    ref_matched = reference_forward(x, *params, compute_dtype=COMPUTE_DTYPE)
    assert jnp.allclose(out, ref_matched, atol=1e-4, rtol=1e-4), \
        float(jnp.max(jnp.abs(out - ref_matched)))
    # Sanity check against the pure-f32 PyTorch-equivalent forward.
    ref_f32 = reference_forward(x, *params)
    assert jnp.allclose(out, ref_f32, atol=5e-2, rtol=5e-2), \
        float(jnp.max(jnp.abs(out - ref_f32)))

    print("KERNEL_OK")
</pallas_src>

<mosaic_0001>
module attributes {stable_mosaic.version = 11 : i64} {
  func.func @_lstm_mlp_kernel(%arg0: i32, %arg1: memref<256x11xf32, #tpu.memory_space<vmem>>, %arg2: memref<11x32xbf16, #tpu.memory_space<vmem>>, %arg3: memref<1x32xf32, #tpu.memory_space<vmem>>, %arg4: memref<2x32x32xbf16, #tpu.memory_space<vmem>>, %arg5: memref<2x1x32xf32, #tpu.memory_space<vmem>>, %arg6: memref<1x32xbf16, #tpu.memory_space<vmem>>, %arg7: memref<1x1xf32, #tpu.memory_space<vmem>>, %arg8: memref<1x256xf32, #tpu.memory_space<vmem>>) attributes {dimension_semantics = [#tpu.dimension_semantics<parallel>], iteration_bounds = array<i64: 2>, scalar_prefetch = 0 : i64, scratch_operands = 0 : i64, tpu.core_type = #tpu.core_type<tc>, window_params = [{transform_indices = @transform_0, window_bounds = array<i64: 256, 11>}, {pipeline_mode = #tpu.pipeline_mode<synchronous>, transform_indices = @transform_1, window_bounds = array<i64: 11, 32>}, {pipeline_mode = #tpu.pipeline_mode<synchronous>, transform_indices = @transform_2, window_bounds = array<i64: 1, 32>}, {pipeline_mode = #tpu.pipeline_mode<synchronous>, transform_indices = @transform_3, window_bounds = array<i64: 2, 32, 32>}, {pipeline_mode = #tpu.pipeline_mode<synchronous>, transform_indices = @transform_4, window_bounds = array<i64: 2, 1, 32>}, {pipeline_mode = #tpu.pipeline_mode<synchronous>, transform_indices = @transform_5, window_bounds = array<i64: 1, 32>}, {pipeline_mode = #tpu.pipeline_mode<synchronous>, transform_indices = @transform_6, window_bounds = array<i64: 1, 1>}, {transform_indices = @transform_7, window_bounds = array<i64: 1, 256>}]} {
    %c0 = arith.constant 0 : index
    %c0_0 = arith.constant 0 : index
    %0 = vector.load %arg1[%c0, %c0_0] : memref<256x11xf32, #tpu.memory_space<vmem>>, vector<256x11xf32>
    %1 = arith.truncf %0 : vector<256x11xf32> to vector<256x11xbf16>
    %c0_1 = arith.constant 0 : index
    %c0_2 = arith.constant 0 : index
    %2 = vector.load %arg2[%c0_1, %c0_2] : memref<11x32xbf16, #tpu.memory_space<vmem>>, vector<11x32xbf16>
    %cst = arith.constant dense<0.000000e+00> : vector<256x32xf32>
    %3 = tpu.matmul %1, %2, %cst {dimension_numbers = #tpu.dot_dimension_numbers<[1], [0], [0], [1], [0, 0, 1, 1], [], []>} : vector<256x11xbf16>, vector<11x32xbf16>, vector<256x32xf32> -> vector<256x32xf32>
    %c0_3 = arith.constant 0 : index
    %c0_4 = arith.constant 0 : index
    %4 = vector.load %arg3[%c0_3, %c0_4] : memref<1x32xf32, #tpu.memory_space<vmem>>, vector<1x32xf32>
    %5 = vector.broadcast %4 : vector<1x32xf32> to vector<256x32xf32>
    %6 = arith.addf %3, %5 : vector<256x32xf32>
    %cst_5 = arith.constant 0.000000e+00 : f32
    %7 = vector.broadcast %cst_5 : f32 to vector<256x32xf32>
    %8 = arith.maximumf %6, %7 : vector<256x32xf32>
    %9 = arith.truncf %8 : vector<256x32xf32> to vector<256x32xbf16>
    %c0_6 = arith.constant 0 : index
    %c0_7 = arith.constant 0 : index
    %c0_8 = arith.constant 0 : index
    %10 = vector.load %arg4[%c0_6, %c0_7, %c0_8] : memref<2x32x32xbf16, #tpu.memory_space<vmem>>, vector<1x32x32xbf16>
    %11 = vector.shape_cast %10 : vector<1x32x32xbf16> to vector<32x32xbf16>
    %cst_9 = arith.constant dense<0.000000e+00> : vector<256x32xf32>
    %12 = tpu.matmul %9, %11, %cst_9 {dimension_numbers = #tpu.dot_dimension_numbers<[1], [0], [0], [1], [0, 0, 1, 1], [], []>} : vector<256x32xbf16>, vector<32x32xbf16>, vector<256x32xf32> -> vector<256x32xf32>
    %c0_10 = arith.constant 0 : index
    %c0_11 = arith.constant 0 : index
    %c0_12 = arith.constant 0 : index
    %13 = vector.load %arg5[%c0_10, %c0_11, %c0_12] : memref<2x1x32xf32, #tpu.memory_space<vmem>>, vector<1x1x32xf32>
    %14 = vector.shape_cast %13 : vector<1x1x32xf32> to vector<1x32xf32>
    %15 = vector.broadcast %14 : vector<1x32xf32> to vector<256x32xf32>
    %16 = arith.addf %12, %15 : vector<256x32xf32>
    %cst_13 = arith.constant 0.000000e+00 : f32
    %17 = vector.broadcast %cst_13 : f32 to vector<256x32xf32>
    %18 = arith.maximumf %16, %17 : vector<256x32xf32>
    %19 = arith.truncf %18 : vector<256x32xf32> to vector<256x32xbf16>
    %c1 = arith.constant 1 : index
    %c0_14 = arith.constant 0 : index
    %c0_15 = arith.constant 0 : index
    %20 = vector.load %arg4[%c1, %c0_14, %c0_15] : memref<2x32x32xbf16, #tpu.memory_space<vmem>>, vector<1x32x32xbf16>
    %21 = vector.shape_cast %20 : vector<1x32x32xbf16> to vector<32x32xbf16>
    %cst_16 = arith.constant dense<0.000000e+00> : vector<256x32xf32>
    %22 = tpu.matmul %19, %21, %cst_16 {dimension_numbers = #tpu.dot_dimension_numbers<[1], [0], [0], [1], [0, 0, 1, 1], [], []>} : vector<256x32xbf16>, vector<32x32xbf16>, vector<256x32xf32> -> vector<256x32xf32>
    %c1_17 = arith.constant 1 : index
    %c0_18 = arith.constant 0 : index
    %c0_19 = arith.constant 0 : index
    %23 = vector.load %arg5[%c1_17, %c0_18, %c0_19] : memref<2x1x32xf32, #tpu.memory_space<vmem>>, vector<1x1x32xf32>
    %24 = vector.shape_cast %23 : vector<1x1x32xf32> to vector<1x32xf32>
    %25 = vector.broadcast %24 : vector<1x32xf32> to vector<256x32xf32>
    %26 = arith.addf %22, %25 : vector<256x32xf32>
    %cst_20 = arith.constant 0.000000e+00 : f32
    %27 = vector.broadcast %cst_20 : f32 to vector<256x32xf32>
    %28 = arith.maximumf %26, %27 : vector<256x32xf32>
    %c0_21 = arith.constant 0 : index
    %c0_22 = arith.constant 0 : index
    %29 = vector.load %arg6[%c0_21, %c0_22] : memref<1x32xbf16, #tpu.memory_space<vmem>>, vector<1x32xbf16>
    %30 = arith.truncf %28 : vector<256x32xf32> to vector<256x32xbf16>
    %cst_23 = arith.constant dense<0.000000e+00> : vector<1x256xf32>
    %31 = tpu.matmul %29, %30, %cst_23 {dimension_numbers = #tpu.dot_dimension_numbers<[1], [1], [0], [0], [0, 0, 1, 0], [], []>} : vector<1x32xbf16>, vector<256x32xbf16>, vector<1x256xf32> -> vector<1x256xf32>
    %c0_24 = arith.constant 0 : index
    %c0_25 = arith.constant 0 : index
    %32 = vector.load %arg7[%c0_24, %c0_25] : memref<1x1xf32, #tpu.memory_space<vmem>>, vector<1x1xf32>
    %33 = vector.broadcast %32 : vector<1x1xf32> to vector<1x256xf32>
    %34 = arith.addf %31, %33 : vector<1x256xf32>
    %c0_26 = arith.constant 0 : index
    %c0_27 = arith.constant 0 : index
    %35 = vector.load %arg8[%c0_26, %c0_27] : memref<1x256xf32, #tpu.memory_space<vmem>>, vector<1x256xf32>
    tpu.vector_store %arg8[%c0_26, %c0_27], %34 {strides = array<i32>} : memref<1x256xf32, #tpu.memory_space<vmem>>, vector<1x256xf32>,
    return
  }
  func.func @transform_0(%arg0: i32) -> (i32, i32) {
    %c0_i32 = arith.constant 0 : i32
    %c0_i32_0 = arith.constant 0 : i32
    return %arg0, %c0_i32 : i32, i32
  }
  func.func @transform_1(%arg0: i32) -> (i32, i32) {
    %c0_i32 = arith.constant 0 : i32
    %c0_i32_0 = arith.constant 0 : i32
    %c0_i32_1 = arith.constant 0 : i32
    return %c0_i32, %c0_i32_0 : i32, i32
  }
  func.func @transform_2(%arg0: i32) -> (i32, i32) {
    %c0_i32 = arith.constant 0 : i32
    %c0_i32_0 = arith.constant 0 : i32
    %c0_i32_1 = arith.constant 0 : i32
    return %c0_i32, %c0_i32_0 : i32, i32
  }
  func.func @transform_3(%arg0: i32) -> (i32, i32, i32) {
    %c0_i32 = arith.constant 0 : i32
    %c0_i32_0 = arith.constant 0 : i32
    %c0_i32_1 = arith.constant 0 : i32
    %c0_i32_2 = arith.constant 0 : i32
    return %c0_i32, %c0_i32_0, %c0_i32_1 : i32, i32, i32
  }
  func.func @transform_4(%arg0: i32) -> (i32, i32, i32) {
    %c0_i32 = arith.constant 0 : i32
    %c0_i32_0 = arith.constant 0 : i32
    %c0_i32_1 = arith.constant 0 : i32
    %c0_i32_2 = arith.constant 0 : i32
    return %c0_i32, %c0_i32_0, %c0_i32_1 : i32, i32, i32
  }
  func.func @transform_5(%arg0: i32) -> (i32, i32) {
    %c0_i32 = arith.constant 0 : i32
    %c0_i32_0 = arith.constant 0 : i32
    %c0_i32_1 = arith.constant 0 : i32
    return %c0_i32, %c0_i32_0 : i32, i32
  }
  func.func @transform_6(%arg0: i32) -> (i32, i32) {
    %c0_i32 = arith.constant 0 : i32
    %c0_i32_0 = arith.constant 0 : i32
    %c0_i32_1 = arith.constant 0 : i32
    return %c0_i32, %c0_i32_0 : i32, i32
  }
  func.func @transform_7(%arg0: i32) -> (i32, i32) {
    %c0_i32 = arith.constant 0 : i32
    %c0_i32_0 = arith.constant 0 : i32
    return %c0_i32, %arg0 : i32, i32
  }
}

</mosaic_0001>

<llo_original>
// kernel: tpu_custom_call.1
$region0: #{tpu_custom_call.1}
  #allocation0 [shape = 'u32[]', space=smem, size = 0x4, offset = 0x4, fixed_abs, tag = 'smem constant byte address 0x4 - core index']
  #allocation1 [shape = 'u32[72,128]{1,0:T(1,128)}', space=vmem, size = 0x9000, scoped, tag = 'internal scratch']
  #allocation2 [shape = 'f32[1,1]{1,0:T(1,128)S(1)}', space=vmem, size = 0x200, scoped, tag = 'scoped memory for tpu_custom_call.1']
  %s0 = inlined_call_operand.vmem [shape: f32[512,11], index: 0, kind: input, shape index: {}]
  %s1 = inlined_call_operand.vmem [shape: bf16[11,32], index: 1, kind: input, shape index: {}]
  %s2 = inlined_call_operand.vmem [shape: f32[1,32], index: 2, kind: input, shape index: {}]
  %s3 = inlined_call_operand.vmem [shape: bf16[2,32,32], index: 3, kind: input, shape index: {}]
  %s4 = inlined_call_operand.vmem [shape: f32[2,1,32], index: 4, kind: input, shape index: {}]
  %s5 = inlined_call_operand.vmem [shape: bf16[1,32], index: 5, kind: input, shape index: {}]
  %s6 = inlined_call_operand.<no memory space> [shape: f32[1,1], index: 6, kind: input, shape index: {}]
  %s7 = inlined_call_operand.hbm [shape: f32[1,512], index: 7, kind: output, shape index: {}]
  %s8 = sld [smem:[#allocation0]]
  $region61: #{tpu_custom_call.1} parent=0
    _
  %s10 = ssub.s32 1, %s8
  %s11 = scalar_select 0, %s10, %s8
  %v12 = vstv %s6
  %13 = vst [vmem:[#allocation2] sm:$0x1] %v12
  $region1: #{tpu_custom_call.1} parent=0
    #allocation3 [shape = 'u8[2048]{0}', space=vmem, size = 0x800, scoped, tag = 'output window, operand 0']
    #allocation4 [shape = 's32[2]{0}', space=sflag, size = 0x8, scoped, tag = 'scoped memory for tpu_custom_call.1']
    %14 = vsyncpa [#allocation4], 0
    %s15 = scalar_lea.sflag [#allocation4], 1
    %16 = vsyncpa %s15, 0
    loop: start=0, step=1, limit=4
    $region2: #{tpu_custom_call.1} parent=1 // loop_pre_header
      _
    $region3: #{tpu_custom_call.1} parent=1 // loop_header
      %s18 = sphi 0, %s22
      %p19 = scmp.ge.s32.totalorder %s18, 4
      %s28 = sphi 0, %s30
      %s31 = sphi 0, %s28
      %s32 = sphi 0, %s31
      %s48 = sphi 0, %s32
      %s52 = sphi 0, %s52
      %s54 = sphi 0, %s52
      %s55 = sphi 0, %s54
      %s69 = sphi 0, %s55
      %s73 = sphi 0, %s73
      %s75 = sphi 0, %s73
      %s76 = sphi 0, %s75
      %s90 = sphi 0, %s76
      %s94 = sphi 0, %s94
      %s96 = sphi 0, %s94
      %s97 = sphi 0, %s96
      %s111 = sphi 0, %s97
      %s115 = sphi 0, %s115
      %s117 = sphi 0, %s115
      %s118 = sphi 0, %s117
      %s132 = sphi 0, %s118
      %s136 = sphi 0, %s136
      %s138 = sphi 0, %s136
      %s139 = sphi 0, %s138
      %s153 = sphi 0, %s139
      %s157 = sphi 0, %s157
      %s159 = sphi 0, %s157
      %s160 = sphi 0, %s159
      %s174 = sphi 0, %s160
      %s180 = sphi 0, %s182
      %s183 = sphi 0, %s180
      %s184 = sphi 0, %s183
      %s200 = sphi 0, %s184
    $region4: #{tpu_custom_call.1} parent=1 // loop_header_branch
      %21 = sbr.rel (%p19) target = $region8
    $region5: #{tpu_custom_call.1} parent=1 // loop_body
      %s23 = ssub.s32 %s18, 1
      %s24 = ssub.s32 %s18, 2
      %s25 = sadd.s32 %s18, 1
      %s26 = ssub.s32 %s18, %s25
      %p27 = scmp.eq.s32.totalorder %s26, 0
      %s29 = sadd.s32 %s28, 1
      %s30 = scalar_select %p27, %s28, %s29
      %p33 = pneg %p27
      %p34 = scmp.eq.s32.totalorder %s18, 1
      %p35 = por %p33, %p34
      %p36 = scmp.ne.s32.totalorder %s28, %s31
      %p37 = scmp.eq.s32.totalorder %s18, 0
      %p38 = por %p36, %p37
      %p39 = scmp.ne.s32.totalorder %s28, %s31
      %p40 = scmp.eq.s32.totalorder %s23, 1
      %p41 = por %p39, %p40
      %p42 = scmp.ne.s32.totalorder %s31, %s32
      %p43 = scmp.eq.s32.totalorder %s23, 0
      %p44 = por %p42, %p43
      %p45 = scmp.ne.s32.totalorder %s31, %s32
      %p46 = scmp.eq.s32.totalorder %s24, 1
      %p47 = por %p45, %p46
      %p49 = scmp.ne.s32.totalorder %s32, %s48
      %p50 = scmp.eq.s32.totalorder %s24, 0
      %p51 = por %p49, %p50
      %s53 = sadd.s32 %s52, 1
      %p56 = scmp.eq.s32.totalorder %s18, 1
      %p57 = scmp.ne.s32.totalorder %s52, %s54
      %p58 = scmp.eq.s32.totalorder %s18, 0
      %p59 = por %p57, %p58
      %p60 = scmp.ne.s32.totalorder %s52, %s54
      %p61 = scmp.eq.s32.totalorder %s23, 1
      %p62 = por %p60, %p61
      %p63 = scmp.ne.s32.totalorder %s54, %s55
      %p64 = scmp.eq.s32.totalorder %s23, 0
      %p65 = por %p63, %p64
      %p66 = scmp.ne.s32.totalorder %s54, %s55
      %p67 = scmp.eq.s32.totalorder %s24, 1
      %p68 = por %p66, %p67
      %p70 = scmp.ne.s32.totalorder %s55, %s69
      %p71 = scmp.eq.s32.totalorder %s24, 0
      %p72 = por %p70, %p71
      %s74 = sadd.s32 %s73, 1
      %p77 = scmp.eq.s32.totalorder %s18, 1
      %p78 = scmp.ne.s32.totalorder %s73, %s75
      %p79 = scmp.eq.s32.totalorder %s18, 0
      %p80 = por %p78, %p79
      %p81 = scmp.ne.s32.totalorder %s73, %s75
      %p82 = scmp.eq.s32.totalorder %s23, 1
      %p83 = por %p81, %p82
      %p84 = scmp.ne.s32.totalorder %s75, %s76
      %p85 = scmp.eq.s32.totalorder %s23, 0
      %p86 = por %p84, %p85
      %p87 = scmp.ne.s32.totalorder %s75, %s76
      %p88 = scmp.eq.s32.totalorder %s24, 1
      %p89 = por %p87, %p88
      %p91 = scmp.ne.s32.totalorder %s76, %s90
      %p92 = scmp.eq.s32.totalorder %s24, 0
      %p93 = por %p91, %p92
      %s95 = sadd.s32 %s94, 1
      %p98 = scmp.eq.s32.totalorder %s18, 1
      %p99 = scmp.ne.s32.totalorder %s94, %s96
      %p100 = scmp.eq.s32.totalorder %s18, 0
      %p101 = por %p99, %p100
      %p102 = scmp.ne.s32.totalorder %s94, %s96
      %p103 = scmp.eq.s32.totalorder %s23, 1
      %p104 = por %p102, %p103
      %p105 = scmp.ne.s32.totalorder %s96, %s97
      %p106 = scmp.eq.s32.totalorder %s23, 0
      %p107 = por %p105, %p106
      %p108 = scmp.ne.s32.totalorder %s96, %s97
      %p109 = scmp.eq.s32.totalorder %s24, 1
      %p110 = por %p108, %p109
      %p112 = scmp.ne.s32.totalorder %s97, %s111
      %p113 = scmp.eq.s32.totalorder %s24, 0
      %p114 = por %p112, %p113
      %s116 = sadd.s32 %s115, 1
      %p119 = scmp.eq.s32.totalorder %s18, 1
      %p120 = scmp.ne.s32.totalorder %s115, %s117
      %p121 = scmp.eq.s32.totalorder %s18, 0
      %p122 = por %p120, %p121
      %p123 = scmp.ne.s32.totalorder %s115, %s117
      %p124 = scmp.eq.s32.totalorder %s23, 1
      %p125 = por %p123, %p124
      %p126 = scmp.ne.s32.totalorder %s117, %s118
      %p127 = scmp.eq.s32.totalorder %s23, 0
      %p128 = por %p126, %p127
      %p129 = scmp.ne.s32.totalorder %s117, %s118
      %p130 = scmp.eq.s32.totalorder %s24, 1
      %p131 = por %p129, %p130
      %p133 = scmp.ne.s32.totalorder %s118, %s132
      %p134 = scmp.eq.s32.totalorder %s24, 0
      %p135 = por %p133, %p134
      %s137 = sadd.s32 %s136, 1
      %p140 = scmp.eq.s32.totalorder %s18, 1
      %p141 = scmp.ne.s32.totalorder %s136, %s138
      %p142 = scmp.eq.s32.totalorder %s18, 0
      %p143 = por %p141, %p142
      %p144 = scmp.ne.s32.totalorder %s136, %s138
      %p145 = scmp.eq.s32.totalorder %s23, 1
      %p146 = por %p144, %p145
      %p147 = scmp.ne.s32.totalorder %s138, %s139
      %p148 = scmp.eq.s32.totalorder %s23, 0
      %p149 = por %p147, %p148
      %p150 = scmp.ne.s32.totalorder %s138, %s139
      %p151 = scmp.eq.s32.totalorder %s24, 1
      %p152 = por %p150, %p151
      %p154 = scmp.ne.s32.totalorder %s139, %s153
      %p155 = scmp.eq.s32.totalorder %s24, 0
      %p156 = por %p154, %p155
      %s158 = sadd.s32 %s157, 1
      %p161 = scmp.eq.s32.totalorder %s18, 1
      %p162 = scmp.ne.s32.totalorder %s157, %s159
      %p163 = scmp.eq.s32.totalorder %s18, 0
      %p164 = por %p162, %p163
      %p165 = scmp.ne.s32.totalorder %s157, %s159
      %p166 = scmp.eq.s32.totalorder %s23, 1
      %p167 = por %p165, %p166
      %p168 = scmp.ne.s32.totalorder %s159, %s160
      %p169 = scmp.eq.s32.totalorder %s23, 0
      %p170 = por %p168, %p169
      %p171 = scmp.ne.s32.totalorder %s159, %s160
      %p172 = scmp.eq.s32.totalorder %s24, 1
      %p173 = por %p171, %p172
      %p175 = scmp.ne.s32.totalorder %s160, %s174
      %p176 = scmp.eq.s32.totalorder %s24, 0
      %p177 = por %p175, %p176
      %s178 = ssub.s32 %s18, %s25
      %p179 = scmp.eq.s32.totalorder %s178, 0
      %s181 = sadd.s32 %s180, 1
      %s182 = scalar_select %p179, %s180, %s181
      %p185 = pneg %p179
      %p186 = scmp.eq.s32.totalorder %s18, 1
      %p187 = por %p185, %p186
      %p188 = scmp.ne.s32.totalorder %s180, %s183
      %p189 = scmp.eq.s32.totalorder %s18, 0
      %p190 = por %p188, %p189
      %p191 = scmp.ne.s32.totalorder %s180, %s183
      %p192 = scmp.eq.s32.totalorder %s23, 1
      %p193 = por %p191, %p192
      %p194 = scmp.ne.s32.totalorder %s183, %s184
      %p195 = scmp.eq.s32.totalorder %s23, 0
      %p196 = por %p194, %p195
      %p197 = scmp.ne.s32.totalorder %s183, %s184
      %p198 = scmp.eq.s32.totalorder %s24, 1
      %p199 = por %p197, %p198
      %p201 = scmp.ne.s32.totalorder %s184, %s200
      %p202 = scmp.eq.s32.totalorder %s24, 0
      %p203 = por %p201, %p202
      %p204 = scmp.le.s32.totalorder 1, %s18
      %p205 = scmp.lt.s32.totalorder %s18, 3
      %p206 = pnand %p204, %p205
      %p207 = pneg %p206
      // Predicated region
      $region9: #{tpu_custom_call.1} parent=5 // pred_check
        _
      $region10: #{tpu_custom_call.1} parent=5 // pred_check_branch
        %209 = sbr.rel (%p206) target = $region12
      $region11: #{tpu_custom_call.1} parent=5 // pred_region
        %s210 = ssub.s32 %s18, 1
        // Predicated region
        $region13: #{tpu_custom_call.1} parent=11 // pred_check
          %p211 = pneg %p65
        $region14: #{tpu_custom_call.1} parent=11 // pred_check_branch
          %213 = sbr.rel (%p211) target = $region16
        $region15: #{tpu_custom_call.1} parent=11 // pred_region
          _
        $region16: #{tpu_custom_call.1} parent=11 // pred_fallthru
          _
        // Predicated region
        $region17: #{tpu_custom_call.1} parent=11 // pred_check
          %p214 = pneg %p86
        $region18: #{tpu_custom_call.1} parent=11 // pred_check_branch
          %216 = sbr.rel (%p214) target = $region20
        $region19: #{tpu_custom_call.1} parent=11 // pred_region
          _
        $region20: #{tpu_custom_call.1} parent=11 // pred_fallthru
          _
        // Predicated region
        $region21: #{tpu_custom_call.1} parent=11 // pred_check
          %p217 = pneg %p107
        $region22: #{tpu_custom_call.1} parent=11 // pred_check_branch
          %219 = sbr.rel (%p217) target = $region24
        $region23: #{tpu_custom_call.1} parent=11 // pred_region
          _
        $region24: #{tpu_custom_call.1} parent=11 // pred_fallthru
          _
        // Predicated region
        $region25: #{tpu_custom_call.1} parent=11 // pred_check
          %p220 = pneg %p128
        $region26: #{tpu_custom_call.1} parent=11 // pred_check_branch
          %222 = sbr.rel (%p220) target = $region28
        $region27: #{tpu_custom_call.1} parent=11 // pred_region
          _
        $region28: #{tpu_custom_call.1} parent=11 // pred_fallthru
          _
        // Predicated region
        $region29: #{tpu_custom_call.1} parent=11 // pred_check
          %p223 = pneg %p149
        $region30: #{tpu_custom_call.1} parent=11 // pred_check_branch
          %225 = sbr.rel (%p223) target = $region32
        $region31: #{tpu_custom_call.1} parent=11 // pred_region
          _
        $region32: #{tpu_custom_call.1} parent=11 // pred_fallthru
          _
        // Predicated region
        $region33: #{tpu_custom_call.1} parent=11 // pred_check
          %p226 = pneg %p170
        $region34: #{tpu_custom_call.1} parent=11 // pred_check_branch
          %228 = sbr.rel (%p226) target = $region36
        $region35: #{tpu_custom_call.1} parent=11 // pred_region
          _
        $region36: #{tpu_custom_call.1} parent=11 // pred_fallthru
          _
      $region12: #{tpu_custom_call.1} parent=5 // pred_fallthru
        _
      %p229 = scmp.lt.s32.totalorder %s18, 2
      // Predicated region
      $region37: #{tpu_custom_call.1} parent=5 // pred_check
        %p230 = pneg %p229
      $region38: #{tpu_custom_call.1} parent=5 // pred_check_branch
        %232 = sbr.rel (%p230) target = $region40
      $region39: #{tpu_custom_call.1} parent=5 // pred_region
        // Predicated region
        $region41: #{tpu_custom_call.1} parent=39 // pred_check
          %p233 = pneg %p38
        $region42: #{tpu_custom_call.1} parent=39 // pred_check_branch
          %235 = sbr.rel (%p233) target = $region44
        $region43: #{tpu_custom_call.1} parent=39 // pred_region
          %s236 = smul.u32 32, %s18
          %p237 = scmp.lt.s32.totalorder %s236, 63
          %s238 = scalar_select %p237, %s236, 63
          %s239 = smul.addr %s238, 8
          %s240 = scalar_lea.vmem %s0, %s239
          %s241 = smul.u32 32, %s18
        $region44: #{tpu_custom_call.1} parent=39 // pred_fallthru
          _
      $region40: #{tpu_custom_call.1} parent=5 // pred_fallthru
        _
      %p242 = scmp.le.s32.totalorder 1, %s18
      %p243 = scmp.lt.s32.totalorder %s18, 3
      %p244 = pnand %p242, %p243
      %p245 = pneg %p244
      // Predicated region
      $region45: #{tpu_custom_call.1} parent=5 // pred_check
        _
      $region46: #{tpu_custom_call.1} parent=5 // pred_check_branch
        %247 = sbr.rel (%p244) target = $region48
      $region47: #{tpu_custom_call.1} parent=5 // pred_region
        %s248 = ssub.s32 %s18, 1
        %s249 = smul.u32 32, %s23
        %p250 = scmp.lt.s32.totalorder %s249, 63
        %s251 = scalar_select %p250, %s249, 63
        %s252 = smul.addr %s251, 8
        %s253 = scalar_lea.vmem %s0, %s252
        %p254 = pneg %p44
        %p255 = pneg %p41
        %p256 = pneg %p65
        %p257 = pneg %p62
        %p258 = pneg %p86
        %p259 = pneg %p83
        %p260 = pneg %p107
        %p261 = pneg %p104
        %p262 = pneg %p128
        %p263 = pneg %p125
        %p264 = pneg %p149
        %p265 = pneg %p146
        %p266 = pneg %p170
        %p267 = pneg %p167
        %p268 = pneg %p196
        %p269 = pneg %p193
        %s270 = sand.u32 %s183, 1
        %s271 = scalar_lea.sflag [#allocation4], %s270
        %s272 = sand.u32 %s183, 1
        %s273 = smul.addr %s272, 2
        %s274 = scalar_lea.vmem [#allocation3], %s273
        %s275 = smul.u32 32, %s23
        %p276 = scmp.lt.s32.totalorder %s275, 63
        %s277 = scalar_select %p276, %s275, 63
        %s278 = smul.addr %s277, 8
        %s279 = scalar_lea.vmem %s0, %s278
        %s280 = smul.u32 32, %s23
        %s281 = smul.u32 2, %s23
        %v283 = vld [vmem:[%s279] sm:$0xff]
        %v284 = vld [vmem:[%s279 + $0x8] sm:$0xff]
        %v285 = vld [vmem:[%s279 + $0x10] sm:$0xff]
        %v286 = vld [vmem:[%s279 + $0x18] sm:$0xff]
        %v287 = vld [vmem:[%s279 + $0x20] sm:$0xff]
        %v288 = vld [vmem:[%s279 + $0x28] sm:$0xff]
        %v289 = vld [vmem:[%s279 + $0x30] sm:$0xff]
        %v290 = vld [vmem:[%s279 + $0x38] sm:$0xff]
        %v291 = vld [vmem:[%s279 + $0x40] sm:$0xff]
        %v292 = vld [vmem:[%s279 + $0x48] sm:$0xff]
        %v293 = vld [vmem:[%s279 + $0x50] sm:$0xff]
        %v294 = vld [vmem:[%s279 + $0x58] sm:$0xff]
        %v295 = vld [vmem:[%s279 + $0x60] sm:$0xff]
        %v296 = vld [vmem:[%s279 + $0x68] sm:$0xff]
        %v297 = vld [vmem:[%s279 + $0x70] sm:$0xff]
        %v298 = vld [vmem:[%s279 + $0x78] sm:$0xff]
        %v299 = vld [vmem:[%s279 + $0x80] sm:$0xff]
        %v300 = vld [vmem:[%s279 + $0x88] sm:$0xff]
        %v301 = vld [vmem:[%s279 + $0x90] sm:$0xff]
        %v302 = vld [vmem:[%s279 + $0x98] sm:$0xff]
        %v303 = vld [vmem:[%s279 + $0xa0] sm:$0xff]
        %v304 = vld [vmem:[%s279 + $0xa8] sm:$0xff]
        %v305 = vld [vmem:[%s279 + $0xb0] sm:$0xff]
        %v306 = vld [vmem:[%s279 + $0xb8] sm:$0xff]
        %v307 = vld [vmem:[%s279 + $0xc0] sm:$0xff]
        %v308 = vld [vmem:[%s279 + $0xc8] sm:$0xff]
        %v309 = vld [vmem:[%s279 + $0xd0] sm:$0xff]
        %v310 = vld [vmem:[%s279 + $0xd8] sm:$0xff]
        %v311 = vld [vmem:[%s279 + $0xe0] sm:$0xff]
        %v312 = vld [vmem:[%s279 + $0xe8] sm:$0xff]
        %v313 = vld [vmem:[%s279 + $0xf0] sm:$0xff]
        %v314 = vld [vmem:[%s279 + $0xf8] sm:$0xff]
        %v315 = vpack.c.bf16 %v284, %v283
        %v316 = vpack.c.bf16 %v286, %v285
        %v317 = vpack.c.bf16 %v288, %v287
        %v318 = vpack.c.bf16 %v290, %v289
        %v319 = vpack.c.bf16 %v292, %v291
        %v320 = vpack.c.bf16 %v294, %v293
        %v321 = vpack.c.bf16 %v296, %v295
        %v322 = vpack.c.bf16 %v298, %v297
        %v323 = vpack.c.bf16 %v300, %v299
        %v324 = vpack.c.bf16 %v302, %v301
        %v325 = vpack.c.bf16 %v304, %v303
        %v326 = vpack.c.bf16 %v306, %v305
        %v327 = vpack.c.bf16 %v308, %v307
        %v328 = vpack.c.bf16 %v310, %v309
        %v329 = vpack.c.bf16 %v312, %v311
        %v330 = vpack.c.bf16 %v314, %v313
        %v331 = vld [vmem:[%s1] sm:$0xf]
        %v332 = vld [vmem:[%s1 + $0x4] sm:$0x3]
        %v333 = vld [vmem:[%s2] sm:$0x1]
        %v335 = vperm.slane %v333, 0
        %v339 = vunpack.c.l.b16 %v331
        %v340 = vunpack.c.l.b16 %v332
        %v341 = vpack.c.b16 %v340, %v339
        %vm342 = vcmask 89088
        %v344 = vsel %vm342, %v315, 0
        %v347 = vsel %vm342, %v316, 0
        %v350 = vsel %vm342, %v317, 0
        %v353 = vsel %vm342, %v318, 0
        %v356 = vsel %vm342, %v319, 0
        %v359 = vsel %vm342, %v320, 0
        %v362 = vsel %vm342, %v321, 0
        %v365 = vsel %vm342, %v322, 0
        %v368 = vsel %vm342, %v323, 0
        %v371 = vsel %vm342, %v324, 0
        %v374 = vsel %vm342, %v325, 0
        %v377 = vsel %vm342, %v326, 0
        %v380 = vsel %vm342, %v327, 0
        %v383 = vsel %vm342, %v328, 0
        %v386 = vsel %vm342, %v329, 0
        %v389 = vsel %vm342, %v330, 0
        %vm391 = vcmask 1044480
        %vm392 = vcmask 1045504
        %v393 = vsel %vm391, 4294967295, 65535
        %v394 = vsel %vm392, %v393, 0
        %v396 = vand.u32 %v341, %v394
        %398 = vmatpush.bf16.msra.mxu0 0
        %399 = vmatpush.bf16.msra.mxu0 0
        %400 = vmatpush.bf16.msra.mxu0 0
        %401 = vmatpush.bf16.msra.mxu0 0
        %402 = vmatpush.bf16.msra.mxu0 0
        %403 = vmatpush.bf16.msra.mxu0 0
        %404 = vmatpush.bf16.msra.mxu0 0
        %405 = vmatpush.bf16.msra.mxu0 %v396
        %406 = vmatmul.bf16.gmra.mxu0 %v344
        %v407 = vpop.f32.mrf.mxu0
        %v408 = vadd.f32 %v335, %v407
        %v409 = vpop.f32.mrf.mxu0
        %v410 = vadd.f32 %v335, %v409
        %411 = vmatmul.bf16.gmra.mxu0 %v347
        %v412 = vpop.f32.mrf.mxu0
        %v413 = vadd.f32 %v335, %v412
        %v414 = vpop.f32.mrf.mxu0
        %v415 = vadd.f32 %v335, %v414
        %416 = vmatmul.bf16.gmra.mxu0 %v350
        %v417 = vpop.f32.mrf.mxu0
        %v418 = vadd.f32 %v335, %v417
        %v419 = vpop.f32.mrf.mxu0
        %v420 = vadd.f32 %v335, %v419
        %421 = vmatmul.bf16.gmra.mxu0 %v353
        %v422 = vpop.f32.mrf.mxu0
        %v423 = vadd.f32 %v335, %v422
        %v424 = vpop.f32.mrf.mxu0
        %v425 = vadd.f32 %v335, %v424
        %426 = vmatmul.bf16.gmra.mxu0 %v356
        %v427 = vpop.f32.mrf.mxu0
        %v428 = vadd.f32 %v335, %v427
        %v429 = vpop.f32.mrf.mxu0
        %v430 = vadd.f32 %v335, %v429
        %431 = vmatmul.bf16.gmra.mxu0 %v359
        %v432 = vpop.f32.mrf.mxu0
        %v433 = vadd.f32 %v335, %v432
        %v434 = vpop.f32.mrf.mxu0
        %v435 = vadd.f32 %v335, %v434
        %436 = vmatmul.bf16.gmra.mxu0 %v362
        %v437 = vpop.f32.mrf.mxu0
        %v438 = vadd.f32 %v335, %v437
        %v439 = vpop.f32.mrf.mxu0
        %v440 = vadd.f32 %v335, %v439
        %441 = vmatmul.bf16.gmra.mxu0 %v365
        %v442 = vpop.f32.mrf.mxu0
        %v443 = vadd.f32 %v335, %v442
        %v444 = vpop.f32.mrf.mxu0
        %v445 = vadd.f32 %v335, %v444
        %446 = vmatmul.bf16.gmra.mxu0 %v368
        %v447 = vpop.f32.mrf.mxu0
        %v448 = vadd.f32 %v335, %v447
        %v449 = vpop.f32.mrf.mxu0
        %v450 = vadd.f32 %v335, %v449
        %451 = vmatmul.bf16.gmra.mxu0 %v371
        %v452 = vpop.f32.mrf.mxu0
        %v453 = vadd.f32 %v335, %v452
        %v454 = vpop.f32.mrf.mxu0
        %v455 = vadd.f32 %v335, %v454
        %456 = vmatmul.bf16.gmra.mxu0 %v374
        %v457 = vpop.f32.mrf.mxu0
        %v458 = vadd.f32 %v335, %v457
        %v459 = vpop.f32.mrf.mxu0
        %v460 = vadd.f32 %v335, %v459
        %461 = vmatmul.bf16.gmra.mxu0 %v377
        %v462 = vpop.f32.mrf.mxu0
        %v463 = vadd.f32 %v335, %v462
        %v464 = vpop.f32.mrf.mxu0
        %v465 = vadd.f32 %v335, %v464
        %466 = vmatmul.bf16.gmra.mxu0 %v380
        %v467 = vpop.f32.mrf.mxu0
        %v468 = vadd.f32 %v335, %v467
        %v469 = vpop.f32.mrf.mxu0
        %v470 = vadd.f32 %v335, %v469
        %471 = vmatmul.bf16.gmra.mxu0 %v383
        %v472 = vpop.f32.mrf.mxu0
        %v473 = vadd.f32 %v335, %v472
        %v474 = vpop.f32.mrf.mxu0
        %v475 = vadd.f32 %v335, %v474
        %476 = vmatmul.bf16.gmra.mxu0 %v386
        %v477 = vpop.f32.mrf.mxu0
        %v478 = vadd.f32 %v335, %v477
        %v479 = vpop.f32.mrf.mxu0
        %v480 = vadd.f32 %v335, %v479
        %481 = vmatmul.bf16.gmra.mxu0 %v389
        %v482 = vpop.f32.mrf.mxu0
        %v483 = vadd.f32 %v335, %v482
        %v484 = vpop.f32.mrf.mxu0
        %v485 = vadd.f32 %v335, %v484
        %486 = vdwg.mxu0
        %v487 = vmax.f32 %v408, 0.0
        %v488 = vmax.f32 %v410, 0.0
        %v489 = vmax.f32 %v413, 0.0
        %v490 = vmax.f32 %v415, 0.0
        %v491 = vmax.f32 %v418, 0.0
        %v492 = vmax.f32 %v420, 0.0
        %v493 = vmax.f32 %v423, 0.0
        %v494 = vmax.f32 %v425, 0.0
        %v495 = vmax.f32 %v428, 0.0
        %v496 = vmax.f32 %v430, 0.0
        %v497 = vmax.f32 %v433, 0.0
        %v498 = vmax.f32 %v435, 0.0
        %v499 = vmax.f32 %v438, 0.0
        %v500 = vmax.f32 %v440, 0.0
        %v501 = vmax.f32 %v443, 0.0
        %v502 = vmax.f32 %v445, 0.0
        %v503 = vmax.f32 %v448, 0.0
        %v504 = vmax.f32 %v450, 0.0
        %v505 = vmax.f32 %v453, 0.0
        %v506 = vmax.f32 %v455, 0.0
        %v507 = vmax.f32 %v458, 0.0
        %v508 = vmax.f32 %v460, 0.0
        %v509 = vmax.f32 %v463, 0.0
        %v510 = vmax.f32 %v465, 0.0
        %v511 = vmax.f32 %v468, 0.0
        %v512 = vmax.f32 %v470, 0.0
        %v513 = vmax.f32 %v473, 0.0
        %v514 = vmax.f32 %v475, 0.0
        %v515 = vmax.f32 %v478, 0.0
        %v516 = vmax.f32 %v480, 0.0
        %v517 = vmax.f32 %v483, 0.0
        %v518 = vmax.f32 %v485, 0.0
        %v519 = vpack.c.bf16 %v488, %v487
        %v520 = vpack.c.bf16 %v490, %v489
        %v521 = vpack.c.bf16 %v492, %v491
        %v522 = vpack.c.bf16 %v494, %v493
        %v523 = vpack.c.bf16 %v496, %v495
        %v524 = vpack.c.bf16 %v498, %v497
        %v525 = vpack.c.bf16 %v500, %v499
        %v526 = vpack.c.bf16 %v502, %v501
        %v527 = vpack.c.bf16 %v504, %v503
        %v528 = vpack.c.bf16 %v506, %v505
        %v529 = vpack.c.bf16 %v508, %v507
        %v530 = vpack.c.bf16 %v510, %v509
        %v531 = vpack.c.bf16 %v512, %v511
        %v532 = vpack.c.bf16 %v514, %v513
        %v533 = vpack.c.bf16 %v516, %v515
        %v534 = vpack.c.bf16 %v518, %v517
        %v535 = vld [vmem:[%s3] sm:$0xf]
        %v536 = vld [vmem:[%s3 + $0x4] sm:$0xf]
        %v537 = vld [vmem:[%s3 + $0x8] sm:$0xf]
        %v538 = vld [vmem:[%s3 + $0xc] sm:$0xf]
        %v539 = vld [vmem:[%s4] sm:$0x1]
        %v541 = vperm.slane %v539, 0
        %v547 = vunpack.c.l.b16 %v535
        %v548 = vunpack.c.l.b16 %v536
        %v549 = vunpack.c.l.b16 %v537
        %v550 = vunpack.c.l.b16 %v538
        %v551 = vpack.c.b16 %v548, %v547
        %v552 = vpack.c.b16 %v550, %v549
        %vm555 = vcmask 261120
        %v557 = vsel %vm555, %v519, 0
        %v560 = vsel %vm555, %v520, 0
        %v563 = vsel %vm555, %v521, 0
        %v566 = vsel %vm555, %v522, 0
        %v569 = vsel %vm555, %v523, 0
        %v572 = vsel %vm555, %v524, 0
        %v575 = vsel %vm555, %v525, 0
        %v578 = vsel %vm555, %v526, 0
        %v581 = vsel %vm555, %v527, 0
        %v584 = vsel %vm555, %v528, 0
        %v587 = vsel %vm555, %v529, 0
        %v590 = vsel %vm555, %v530, 0
        %v593 = vsel %vm555, %v531, 0
        %v596 = vsel %vm555, %v532, 0
        %v599 = vsel %vm555, %v533, 0
        %v602 = vsel %vm555, %v534, 0
        %604 = vmatpush.bf16.msra.mxu0 0
        %605 = vmatpush.bf16.msra.mxu0 0
        %606 = vmatpush.bf16.msra.mxu0 0
        %607 = vmatpush.bf16.msra.mxu0 0
        %608 = vmatpush.bf16.msra.mxu0 0
        %609 = vmatpush.bf16.msra.mxu0 0
        %610 = vmatpush.bf16.msra.mxu0 %v552
        %611 = vmatpush.bf16.msra.mxu0 %v551
        %612 = vmatmul.bf16.gmra.mxu0 %v557
        %v613 = vpop.f32.mrf.mxu0
        %v614 = vadd.f32 %v541, %v613
        %v615 = vpop.f32.mrf.mxu0
        %v616 = vadd.f32 %v541, %v615
        %617 = vmatmul.bf16.gmra.mxu0 %v560
        %v618 = vpop.f32.mrf.mxu0
        %v619 = vadd.f32 %v541, %v618
        %v620 = vpop.f32.mrf.mxu0
        %v621 = vadd.f32 %v541, %v620
        %622 = vmatmul.bf16.gmra.mxu0 %v563
        %v623 = vpop.f32.mrf.mxu0
        %v624 = vadd.f32 %v541, %v623
        %v625 = vpop.f32.mrf.mxu0
        %v626 = vadd.f32 %v541, %v625
        %627 = vmatmul.bf16.gmra.mxu0 %v566
        %v628 = vpop.f32.mrf.mxu0
        %v629 = vadd.f32 %v541, %v628
        %v630 = vpop.f32.mrf.mxu0
        %v631 = vadd.f32 %v541, %v630
        %632 = vmatmul.bf16.gmra.mxu0 %v569
        %v633 = vpop.f32.mrf.mxu0
        %v634 = vadd.f32 %v541, %v633
        %v635 = vpop.f32.mrf.mxu0
        %v636 = vadd.f32 %v541, %v635
        %637 = vmatmul.bf16.gmra.mxu0 %v572
        %v638 = vpop.f32.mrf.mxu0
        %v639 = vadd.f32 %v541, %v638
        %v640 = vpop.f32.mrf.mxu0
        %v641 = vadd.f32 %v541, %v640
        %642 = vmatmul.bf16.gmra.mxu0 %v575
        %v643 = vpop.f32.mrf.mxu0
        %v644 = vadd.f32 %v541, %v643
        %v645 = vpop.f32.mrf.mxu0
        %v646 = vadd.f32 %v541, %v645
        %647 = vmatmul.bf16.gmra.mxu0 %v578
        %v648 = vpop.f32.mrf.mxu0
        %v649 = vadd.f32 %v541, %v648
        %v650 = vpop.f32.mrf.mxu0
        %v651 = vadd.f32 %v541, %v650
        %652 = vmatmul.bf16.gmra.mxu0 %v581
        %v653 = vpop.f32.mrf.mxu0
        %v654 = vadd.f32 %v541, %v653
        %v655 = vpop.f32.mrf.mxu0
        %v656 = vadd.f32 %v541, %v655
        %657 = vmatmul.bf16.gmra.mxu0 %v584
        %v658 = vpop.f32.mrf.mxu0
        %v659 = vadd.f32 %v541, %v658
        %v660 = vpop.f32.mrf.mxu0
        %v661 = vadd.f32 %v541, %v660
        %662 = vmatmul.bf16.gmra.mxu0 %v587
        %v663 = vpop.f32.mrf.mxu0
        %v664 = vadd.f32 %v541, %v663
        %v665 = vpop.f32.mrf.mxu0
        %v666 = vadd.f32 %v541, %v665
        %667 = vmatmul.bf16.gmra.mxu0 %v590
        %v668 = vpop.f32.mrf.mxu0
        %v669 = vadd.f32 %v541, %v668
        %v670 = vpop.f32.mrf.mxu0
        %v671 = vadd.f32 %v541, %v670
        %672 = vmatmul.bf16.gmra.mxu0 %v593
        %v673 = vpop.f32.mrf.mxu0
        %v674 = vadd.f32 %v541, %v673
        %v675 = vpop.f32.mrf.mxu0
        %v676 = vadd.f32 %v541, %v675
        %677 = vmatmul.bf16.gmra.mxu0 %v596
        %v678 = vpop.f32.mrf.mxu0
        %v679 = vadd.f32 %v541, %v678
        %v680 = vpop.f32.mrf.mxu0
        %v681 = vadd.f32 %v541, %v680
        %682 = vmatmul.bf16.gmra.mxu0 %v599
        %v683 = vpop.f32.mrf.mxu0
        %v684 = vadd.f32 %v541, %v683
        %v685 = vpop.f32.mrf.mxu0
        %v686 = vadd.f32 %v541, %v685
        %687 = vmatmul.bf16.gmra.mxu0 %v602
        %v688 = vpop.f32.mrf.mxu0
        %v689 = vadd.f32 %v541, %v688
        %v690 = vpop.f32.mrf.mxu0
        %v691 = vadd.f32 %v541, %v690
        %692 = vdwg.mxu0
        %v693 = vmax.f32 %v614, 0.0
        %v694 = vmax.f32 %v616, 0.0
        %v695 = vmax.f32 %v619, 0.0
        %v696 = vmax.f32 %v621, 0.0
        %v697 = vmax.f32 %v624, 0.0
        %v698 = vmax.f32 %v626, 0.0
        %v699 = vmax.f32 %v629, 0.0
        %v700 = vmax.f32 %v631, 0.0
        %v701 = vmax.f32 %v634, 0.0
        %v702 = vmax.f32 %v636, 0.0
        %v703 = vmax.f32 %v639, 0.0
        %v704 = vmax.f32 %v641, 0.0
        %v705 = vmax.f32 %v644, 0.0
        %v706 = vmax.f32 %v646, 0.0
        %v707 = vmax.f32 %v649, 0.0
        %v708 = vmax.f32 %v651, 0.0
        %v709 = vmax.f32 %v654, 0.0
        %v710 = vmax.f32 %v656, 0.0
        %v711 = vmax.f32 %v659, 0.0
        %v712 = vmax.f32 %v661, 0.0
        %v713 = vmax.f32 %v664, 0.0
        %v714 = vmax.f32 %v666, 0.0
        %v715 = vmax.f32 %v669, 0.0
        %v716 = vmax.f32 %v671, 0.0
        %v717 = vmax.f32 %v674, 0.0
        %v718 = vmax.f32 %v676, 0.0
        %v719 = vmax.f32 %v679, 0.0
        %v720 = vmax.f32 %v681, 0.0
        %v721 = vmax.f32 %v684, 0.0
        %v722 = vmax.f32 %v686, 0.0
        %v723 = vmax.f32 %v689, 0.0
        %v724 = vmax.f32 %v691, 0.0
        %v725 = vpack.c.bf16 %v694, %v693
        %v726 = vpack.c.bf16 %v696, %v695
        %v727 = vpack.c.bf16 %v698, %v697
        %v728 = vpack.c.bf16 %v700, %v699
        %v729 = vpack.c.bf16 %v702, %v701
        %v730 = vpack.c.bf16 %v704, %v703
        %v731 = vpack.c.bf16 %v706, %v705
        %v732 = vpack.c.bf16 %v708, %v707
        %v733 = vpack.c.bf16 %v710, %v709
        %v734 = vpack.c.bf16 %v712, %v711
        %v735 = vpack.c.bf16 %v714, %v713
        %v736 = vpack.c.bf16 %v716, %v715
        %v737 = vpack.c.bf16 %v718, %v717
        %v738 = vpack.c.bf16 %v720, %v719
        %v739 = vpack.c.bf16 %v722, %v721
        %v740 = vpack.c.bf16 %v724, %v723
        %s741 = scalar_lea.vmem %s3, 16
        %v742 = vld [vmem:[%s741] sm:$0xf]
        %v743 = vld [vmem:[%s741 + $0x4] sm:$0xf]
        %v744 = vld [vmem:[%s741 + $0x8] sm:$0xf]
        %v745 = vld [vmem:[%s741 + $0xc] sm:$0xf]
        %s746 = scalar_lea.vmem %s4, 1
        %v747 = vld [vmem:[%s746] sm:$0x1]
        %v749 = vperm.slane %v747, 0
        %v755 = vunpack.c.l.b16 %v742
        %v756 = vunpack.c.l.b16 %v743
        %v757 = vunpack.c.l.b16 %v744
        %v758 = vunpack.c.l.b16 %v745
        %v759 = vpack.c.b16 %v756, %v755
        %v760 = vpack.c.b16 %v758, %v757
        %v764 = vsel %vm555, %v725, 0
        %v767 = vsel %vm555, %v726, 0
        %v770 = vsel %vm555, %v727, 0
        %v773 = vsel %vm555, %v728, 0
        %v776 = vsel %vm555, %v729, 0
        %v779 = vsel %vm555, %v730, 0
        %v782 = vsel %vm555, %v731, 0
        %v785 = vsel %vm555, %v732, 0
        %v788 = vsel %vm555, %v733, 0
        %v791 = vsel %vm555, %v734, 0
        %v794 = vsel %vm555, %v735, 0
        %v797 = vsel %vm555, %v736, 0
        %v800 = vsel %vm555, %v737, 0
        %v803 = vsel %vm555, %v738, 0
        %v806 = vsel %vm555, %v739, 0
        %v809 = vsel %vm555, %v740, 0
        %811 = vmatpush.bf16.msra.mxu0 0
        %812 = vmatpush.bf16.msra.mxu0 0
        %813 = vmatpush.bf16.msra.mxu0 0
        %814 = vmatpush.bf16.msra.mxu0 0
        %815 = vmatpush.bf16.msra.mxu0 0
        %816 = vmatpush.bf16.msra.mxu0 0
        %817 = vmatpush.bf16.msra.mxu0 %v760
        %818 = vmatpush.bf16.msra.mxu0 %v759
        %819 = vmatmul.bf16.gmra.mxu0 %v764
        %v820 = vpop.f32.mrf.mxu0
        %v821 = vadd.f32 %v749, %v820
        %v822 = vpop.f32.mrf.mxu0
        %v823 = vadd.f32 %v749, %v822
        %824 = vmatmul.bf16.gmra.mxu0 %v767
        %v825 = vpop.f32.mrf.mxu0
        %v826 = vadd.f32 %v749, %v825
        %v827 = vpop.f32.mrf.mxu0
        %v828 = vadd.f32 %v749, %v827
        %829 = vmatmul.bf16.gmra.mxu0 %v770
        %v830 = vpop.f32.mrf.mxu0
        %v831 = vadd.f32 %v749, %v830
        %v832 = vpop.f32.mrf.mxu0
        %v833 = vadd.f32 %v749, %v832
        %834 = vmatmul.bf16.gmra.mxu0 %v773
        %v835 = vpop.f32.mrf.mxu0
        %v836 = vadd.f32 %v749, %v835
        %v837 = vpop.f32.mrf.mxu0
        %v838 = vadd.f32 %v749, %v837
        %839 = vmatmul.bf16.gmra.mxu0 %v776
        %v840 = vpop.f32.mrf.mxu0
        %v841 = vadd.f32 %v749, %v840
        %v842 = vpop.f32.mrf.mxu0
        %v843 = vadd.f32 %v749, %v842
        %844 = vmatmul.bf16.gmra.mxu0 %v779
        %v845 = vpop.f32.mrf.mxu0
        %v846 = vadd.f32 %v749, %v845
        %v847 = vpop.f32.mrf.mxu0
        %v848 = vadd.f32 %v749, %v847
        %849 = vmatmul.bf16.gmra.mxu0 %v782
        %v850 = vpop.f32.mrf.mxu0
        %v851 = vadd.f32 %v749, %v850
        %v852 = vpop.f32.mrf.mxu0
        %v853 = vadd.f32 %v749, %v852
        %854 = vmatmul.bf16.gmra.mxu0 %v785
        %v855 = vpop.f32.mrf.mxu0
        %v856 = vadd.f32 %v749, %v855
        %v857 = vpop.f32.mrf.mxu0
        %v858 = vadd.f32 %v749, %v857
        %859 = vmatmul.bf16.gmra.mxu0 %v788
        %v860 = vpop.f32.mrf.mxu0
        %v861 = vadd.f32 %v749, %v860
        %v862 = vpop.f32.mrf.mxu0
        %v863 = vadd.f32 %v749, %v862
        %864 = vmatmul.bf16.gmra.mxu0 %v791
        %v865 = vpop.f32.mrf.mxu0
        %v866 = vadd.f32 %v749, %v865
        %v867 = vpop.f32.mrf.mxu0
        %v868 = vadd.f32 %v749, %v867
        %869 = vmatmul.bf16.gmra.mxu0 %v794
        %v870 = vpop.f32.mrf.mxu0
        %v871 = vadd.f32 %v749, %v870
        %v872 = vpop.f32.mrf.mxu0
        %v873 = vadd.f32 %v749, %v872
        %874 = vmatmul.bf16.gmra.mxu0 %v797
        %v875 = vpop.f32.mrf.mxu0
        %v876 = vadd.f32 %v749, %v875
        %v877 = vpop.f32.mrf.mxu0
        %v878 = vadd.f32 %v749, %v877
        %879 = vmatmul.bf16.gmra.mxu0 %v800
        %v880 = vpop.f32.mrf.mxu0
        %v881 = vadd.f32 %v749, %v880
        %v882 = vpop.f32.mrf.mxu0
        %v883 = vadd.f32 %v749, %v882
        %884 = vmatmul.bf16.gmra.mxu0 %v803
        %v885 = vpop.f32.mrf.mxu0
        %v886 = vadd.f32 %v749, %v885
        %v887 = vpop.f32.mrf.mxu0
        %v888 = vadd.f32 %v749, %v887
        %889 = vmatmul.bf16.gmra.mxu0 %v806
        %v890 = vpop.f32.mrf.mxu0
        %v891 = vadd.f32 %v749, %v890
        %v892 = vpop.f32.mrf.mxu0
        %v893 = vadd.f32 %v749, %v892
        %894 = vmatmul.bf16.gmra.mxu0 %v809
        %v895 = vpop.f32.mrf.mxu0
        %v896 = vadd.f32 %v749, %v895
        %v897 = vpop.f32.mrf.mxu0
        %v898 = vadd.f32 %v749, %v897
        %899 = vdwg.mxu0
        %v900 = vmax.f32 %v821, 0.0
        %v901 = vmax.f32 %v823, 0.0
        %v902 = vmax.f32 %v826, 0.0
        %v903 = vmax.f32 %v828, 0.0
        %v904 = vmax.f32 %v831, 0.0
        %v905 = vmax.f32 %v833, 0.0
        %v906 = vmax.f32 %v836, 0.0
        %v907 = vmax.f32 %v838, 0.0
        %v908 = vmax.f32 %v841, 0.0
        %v909 = vmax.f32 %v843, 0.0
        %v910 = vmax.f32 %v846, 0.0
        %v911 = vmax.f32 %v848, 0.0
        %v912 = vmax.f32 %v851, 0.0
        %v913 = vmax.f32 %v853, 0.0
        %v914 = vmax.f32 %v856, 0.0
        %v915 = vmax.f32 %v858, 0.0
        %v916 = vmax.f32 %v861, 0.0
        %v917 = vmax.f32 %v863, 0.0
        %v918 = vmax.f32 %v866, 0.0
        %v919 = vmax.f32 %v868, 0.0
        %v920 = vmax.f32 %v871, 0.0
        %v921 = vmax.f32 %v873, 0.0
        %v922 = vmax.f32 %v876, 0.0
        %v923 = vmax.f32 %v878, 0.0
        %v924 = vmax.f32 %v881, 0.0
        %v925 = vmax.f32 %v883, 0.0
        %v926 = vmax.f32 %v886, 0.0
        %v927 = vmax.f32 %v888, 0.0
        %v928 = vmax.f32 %v891, 0.0
        %v929 = vmax.f32 %v893, 0.0
        %v930 = vmax.f32 %v896, 0.0
        %v931 = vmax.f32 %v898, 0.0
        %v932 = vld [vmem:[%s5] sm:$0x1]
        %v933 = vpack.c.bf16 %v901, %v900
        %v934 = vpack.c.bf16 %v903, %v902
        %v935 = vpack.c.bf16 %v905, %v904
        %v936 = vpack.c.bf16 %v907, %v906
        %v937 = vpack.c.bf16 %v909, %v908
        %v938 = vpack.c.bf16 %v911, %v910
        %v939 = vpack.c.bf16 %v913, %v912
        %v940 = vpack.c.bf16 %v915, %v914
        %v941 = vpack.c.bf16 %v917, %v916
        %v942 = vpack.c.bf16 %v919, %v918
        %v943 = vpack.c.bf16 %v921, %v920
        %v944 = vpack.c.bf16 %v923, %v922
        %v945 = vpack.c.bf16 %v925, %v924
        %v946 = vpack.c.bf16 %v927, %v926
        %v947 = vpack.c.bf16 %v929, %v928
        %v948 = vpack.c.bf16 %v931, %v930
        %v949 = vld [vmem:[#allocation2] sm:$0x1]
        %951 = vset.pattern.permute.xlu0 0
        %952 = vperm.xlu0 %951, %v949
        %v953 = vpop.permute.xlu0 %952
        %v955 = vperm.slane %v953, 0
        %v957 = vsel %vm555, %v932, 0
        %v960 = vsel %vm555, %v933, 0
        %v963 = vsel %vm555, %v934, 0
        %v966 = vsel %vm555, %v935, 0
        %v969 = vsel %vm555, %v936, 0
        %v972 = vsel %vm555, %v937, 0
        %v975 = vsel %vm555, %v938, 0
        %v978 = vsel %vm555, %v939, 0
        %v981 = vsel %vm555, %v940, 0
        %v984 = vsel %vm555, %v941, 0
        %v987 = vsel %vm555, %v942, 0
        %v990 = vsel %vm555, %v943, 0
        %v993 = vsel %vm555, %v944, 0
        %v996 = vsel %vm555, %v945, 0
        %v999 = vsel %vm555, %v946, 0
        %v1002 = vsel %vm555, %v947, 0
        %v1005 = vsel %vm555, %v948, 0
        %1007 = vmatpush.bf16.xpose.msra.mxu0 %v981
        %1008 = vmatpush.bf16.xpose.msra.mxu0 %v978
        %1009 = vmatpush.bf16.xpose.msra.mxu0 %v975
        %1010 = vmatpush.bf16.xpose.msra.mxu0 %v972
        %1011 = vmatpush.bf16.xpose.msra.mxu0 %v969
        %1012 = vmatpush.bf16.xpose.msra.mxu0 %v966
        %1013 = vmatpush.bf16.xpose.msra.mxu0 %v963
        %1014 = vmatpush.bf16.xpose.msra.mxu0 %v960
        %1015 = vmatmul.bf16.gmra.mxu0 %v957
        %v1016 = vpop.f32.mrf.mxu0
        %v1017 = vadd.f32 %v955, %v1016
        %v1018 = vpop.f32.mrf.mxu0
        %1019 = vdwg.mxu0
        %1020 = vmatpush.bf16.xpose.msra.mxu0 %v1005
        %1021 = vmatpush.bf16.xpose.msra.mxu0 %v1002
        %1022 = vmatpush.bf16.xpose.msra.mxu0 %v999
        %1023 = vmatpush.bf16.xpose.msra.mxu0 %v996
        %1024 = vmatpush.bf16.xpose.msra.mxu0 %v993
        %1025 = vmatpush.bf16.xpose.msra.mxu0 %v990
        %1026 = vmatpush.bf16.xpose.msra.mxu0 %v987
        %1027 = vmatpush.bf16.xpose.msra.mxu0 %v984
        %1028 = vmatmul.bf16.gmra.mxu0 %v957
        %v1029 = vpop.f32.mrf.mxu0
        %v1030 = vadd.f32 %v955, %v1029
        %v1031 = vpop.f32.mrf.mxu0
        %1032 = vdwg.mxu0
        %v1035 = vrot.slane %v1030, 7
        %vm1036 = vcmask 1040384
        %v1037 = vsel %vm1036, %v1017, %v1035
        %v1039 = vlaneseq
        %vm1040 = vcmp.ge.s32.totalorder %v1039, 0
        %vm1041 = vcmp.lt.s32.totalorder %v1039, 256
        %vm1042 = vmand %vm1040, %vm1041
        %1043 = vst.msk [vmem:[%s274] sm:$0x3] %vm1042, %v1037
        %s1044 = sand.u32 %s183, 1
        %s1045 = scalar_lea.sflag [#allocation4], %s1044
        %s1046 = sand.u32 %s183, 1
        %s1047 = smul.addr %s1046, 2
        %s1048 = scalar_lea.vmem [#allocation3], %s1047
        // Predicated region
        $region49: #{tpu_custom_call.1} parent=47 // pred_check
          %p1049 = pneg %p193
        $region50: #{tpu_custom_call.1} parent=47 // pred_check_branch
          %1051 = sbr.rel (%p1049) target = $region52
        $region51: #{tpu_custom_call.1} parent=47 // pred_region
          %s1052 = smul.u32 2, %s23
          %1054 = vsyncadd %s1045, 0
          %s1055 = scalar_lea.hbm %s7, %s1052
          %s1057 = sshll.u32 %s1048, 4
          %s1058 = int_to_ptr.vmem [resolvable:$true] %s1057
          %s1059 = sshll.u32 %s1055, 4
          %s1060 = int_to_ptr.hbm [resolvable:$true] %s1059
          %1062 = dma.vmem_to_hbm [thread:$0]  %s1058, 32, %s1060, %s1045
        $region52: #{tpu_custom_call.1} parent=47 // pred_fallthru
          _
      $region48: #{tpu_custom_call.1} parent=5 // pred_fallthru
        _
      %p1063 = scmp.le.s32.totalorder 2, %s18
      // Predicated region
      $region53: #{tpu_custom_call.1} parent=5 // pred_check
        %p1064 = pneg %p1063
      $region54: #{tpu_custom_call.1} parent=5 // pred_check_branch
        %1066 = sbr.rel (%p1064) target = $region56
      $region55: #{tpu_custom_call.1} parent=5 // pred_region
        %s1067 = ssub.s32 %s18, 2
        // Predicated region
        $region57: #{tpu_custom_call.1} parent=55 // pred_check
          %p1068 = pneg %p199
        $region58: #{tpu_custom_call.1} parent=55 // pred_check_branch
          %1070 = sbr.rel (%p1068) target = $region60
        $region59: #{tpu_custom_call.1} parent=55 // pred_region
          %s1071 = sand.u32 %s184, 1
          %s1072 = scalar_lea.sflag [#allocation4], %s1071
          %s1073 = sand.u32 %s184, 1
          %s1074 = smul.addr %s1073, 2
          %s1075 = scalar_lea.vmem [#allocation3], %s1074
          %1077 = dma.done %s1072, 32
        $region60: #{tpu_custom_call.1} parent=55 // pred_fallthru
          _
      $region56: #{tpu_custom_call.1} parent=5 // pred_fallthru
        _
    $region6: #{tpu_custom_call.1} parent=1 // loop_footer
      %s22 = sadd.s32 1, %s18
    $region7: #{tpu_custom_call.1} parent=1 // loop_footer_branch
      %17 = sbr.rel target = $region3
    $region8: #{tpu_custom_call.1} parent=1 // loop_exit
      _
    %1078 = vsyncpa [#allocation4], 1
    %s1079 = scalar_lea.sflag [#allocation4], 1
    %1080 = vsyncpa %s1079, 1

</llo_original>
